<compile_context>
chip_gen: v5e
topology: v5e:2x2
jax: 0.10.0
libtpu: 0.0.40
codegen_flags: <defaults>
</compile_context>

<pallas_src>
import jax
import jax.numpy as jnp
from jax.experimental import pallas as pl
from jax.experimental.pallas import tpu as pltpu


def _attention_kernel(enc_ref,   # (1, Bt*N, H)  encoder outputs, batch-flattened
                      dec_ref,   # (1, Bt, Din)  decoder state
                      mask_ref,  # (1, Bt, N)    1.0 = masked (padding) node
                      w1_ref,    # (H, H)        W1, pre-transposed to (in, out)
                      w2_ref,    # (Din, H)      W2, pre-transposed to (in, out)
                      v_ref,     # (1, H)        vt weight row
                      out_ref):  # (1, Bt, N)    softmax attention scores
    Bt = mask_ref.shape[1]
    N = mask_ref.shape[2]
    H = w1_ref.shape[1]

    enc = enc_ref[0]                                   # (Bt*N, H)
    dec = dec_ref[0]                                   # (Bt, Din)
    mask = mask_ref[0]                                 # (Bt, N)

    # encoder_transform = W1(encoder_outputs): one wide MXU GEMM, M = Bt*N.
    enc_t = jnp.dot(enc, w1_ref[...], preferred_element_type=jnp.float32)   # (Bt*N, H)
    # decoder_transform = W2(decoder_state)
    dec_t = jnp.dot(dec, w2_ref[...], preferred_element_type=jnp.float32)   # (Bt, H)

    # u_i = vt(tanh(enc_t + dec_t)) -> weighted lane reduction over H.
    act = jnp.tanh(enc_t.reshape(Bt, N, H) + dec_t[:, None, :])             # (Bt, N, H)
    u = jnp.sum(act * v_ref[...], axis=-1)                                  # (Bt, N)

    # masked_fill(mask, -inf)
    u = jnp.where(mask > 0.0, -jnp.inf, u)

    # softmax over the node axis
    u_max = jnp.max(u, axis=-1, keepdims=True)
    e = jnp.exp(u - u_max)
    out_ref[0] = e / jnp.sum(e, axis=-1, keepdims=True)


def attention_pallas(decoder_state, encoder_outputs, input_node_mask, params,
                     block_b=2):
    """decoder_state: (B, 2H+z), encoder_outputs: (B, N, H),
    input_node_mask: (B, N) bool or None.  Returns softmax scores (B, N)."""
    B, N, H = encoder_outputs.shape
    Din = decoder_state.shape[1]
    assert B % block_b == 0, "block_b must divide the batch size"
    G = B // block_b

    enc_flat = encoder_outputs.astype(jnp.float32).reshape(G, block_b * N, H)
    dec = decoder_state.astype(jnp.float32).reshape(G, block_b, Din)
    if input_node_mask is None:
        mask = jnp.zeros((G, block_b, N), jnp.float32)
    else:
        mask = input_node_mask.reshape(G, block_b, N).astype(jnp.float32)

    out = pl.pallas_call(
        _attention_kernel,
        out_shape=jax.ShapeDtypeStruct((G, block_b, N), jnp.float32),
        grid=(G,),
        in_specs=[
            pl.BlockSpec((1, block_b * N, H), lambda g: (g, 0, 0)),  # encoder
            pl.BlockSpec((1, block_b, Din), lambda g: (g, 0, 0)),    # decoder
            pl.BlockSpec((1, block_b, N), lambda g: (g, 0, 0)),      # mask
            pl.BlockSpec((H, H), lambda g: (0, 0)),                  # W1
            pl.BlockSpec((Din, H), lambda g: (0, 0)),                # W2
            pl.BlockSpec((1, H), lambda g: (0, 0)),                  # vt
        ],
        out_specs=pl.BlockSpec((1, block_b, N), lambda g: (g, 0, 0)),
        compiler_params=pltpu.CompilerParams(
            dimension_semantics=("parallel",)),
    )(enc_flat, dec, mask, params["w1"], params["w2"], params["v"])
    return out.reshape(B, N)


def attention_ref(decoder_state, encoder_outputs, input_node_mask, params):
    """Pure-JAX reference mirroring the PyTorch forward."""
    enc_t = encoder_outputs @ params["w1"]                       # (B, N, H)
    dec_t = (decoder_state @ params["w2"])[:, None, :]           # (B, 1, H)
    u = jnp.sum(jnp.tanh(enc_t + dec_t) * params["v"][0], axis=-1)   # (B, N)
    if input_node_mask is not None:
        u = jnp.where(input_node_mask, -jnp.inf, u)
    return jax.nn.softmax(u, axis=-1)


def init_params(key, hidden_size, z_dim):
    """Weights stored pre-transposed to (in_features, out_features); no biases
    (all three Linear layers in the module are bias=False)."""
    k1, k2, k3 = jax.random.split(key, 3)
    din = 2 * hidden_size + z_dim
    scale = 0.02
    return {
        "w1": scale * jax.random.normal(k1, (hidden_size, hidden_size), jnp.float32),
        "w2": scale * jax.random.normal(k2, (din, hidden_size), jnp.float32),
        "v":  scale * jax.random.normal(k3, (1, hidden_size), jnp.float32),
    }


if __name__ == "__main__":
    hidden_size, z_dim = 32, 16
    B, N = 4, 8
    din = 2 * hidden_size + z_dim

    key = jax.random.PRNGKey(0)
    k_dec, k_enc, k_p = jax.random.split(key, 3)

    decoder_state = jax.random.normal(k_dec, (B, din), dtype=jnp.float32)
    encoder_outputs = jax.random.normal(k_enc, (B, N, hidden_size), dtype=jnp.float32)
    lengths = jnp.array([8, 5, 6, 3], dtype=jnp.int32)
    # True = padded node (gets -inf before the softmax), matching masked_fill.
    input_node_mask = jnp.arange(N)[None, :] >= lengths[:, None]

    params = init_params(k_p, hidden_size, z_dim)

    scores = attention_pallas(decoder_state, encoder_outputs, input_node_mask,
                              params, block_b=2)
    scores = jax.block_until_ready(scores)

    ref = attention_ref(decoder_state, encoder_outputs, input_node_mask, params)
    assert scores.shape == (B, N)
    assert jnp.allclose(scores, ref, rtol=1e-5, atol=1e-5)
    # probabilities sum to 1 per row
    assert jnp.allclose(jnp.sum(scores, axis=-1), 1.0, rtol=1e-5, atol=1e-5)

    print("KERNEL_OK")
</pallas_src>

<mosaic_0001>
module attributes {stable_mosaic.version = 11 : i64} {
  func.func @_attention_kernel(%arg0: i32, %arg1: memref<1x16x32xf32, #tpu.memory_space<vmem>>, %arg2: memref<1x2x80xf32, #tpu.memory_space<vmem>>, %arg3: memref<1x2x8xf32, #tpu.memory_space<vmem>>, %arg4: memref<32x32xf32, #tpu.memory_space<vmem>>, %arg5: memref<80x32xf32, #tpu.memory_space<vmem>>, %arg6: memref<1x32xf32, #tpu.memory_space<vmem>>, %arg7: memref<1x2x8xf32, #tpu.memory_space<vmem>>) attributes {dimension_semantics = [#tpu.dimension_semantics<parallel>], iteration_bounds = array<i64: 2>, scalar_prefetch = 0 : i64, scratch_operands = 0 : i64, tpu.core_type = #tpu.core_type<tc>, window_params = [{transform_indices = @transform_0, window_bounds = array<i64: 1, 16, 32>}, {transform_indices = @transform_1, window_bounds = array<i64: 1, 2, 80>}, {transform_indices = @transform_2, window_bounds = array<i64: 1, 2, 8>}, {pipeline_mode = #tpu.pipeline_mode<synchronous>, transform_indices = @transform_3, window_bounds = array<i64: 32, 32>}, {pipeline_mode = #tpu.pipeline_mode<synchronous>, transform_indices = @transform_4, window_bounds = array<i64: 80, 32>}, {pipeline_mode = #tpu.pipeline_mode<synchronous>, transform_indices = @transform_5, window_bounds = array<i64: 1, 32>}, {transform_indices = @transform_6, window_bounds = array<i64: 1, 2, 8>}]} {
    %c0 = arith.constant 0 : index
    %c0_0 = arith.constant 0 : index
    %c0_1 = arith.constant 0 : index
    %0 = vector.load %arg1[%c0, %c0_0, %c0_1] : memref<1x16x32xf32, #tpu.memory_space<vmem>>, vector<1x16x32xf32>
    %1 = vector.shape_cast %0 : vector<1x16x32xf32> to vector<16x32xf32>
    %c0_2 = arith.constant 0 : index
    %c0_3 = arith.constant 0 : index
    %c0_4 = arith.constant 0 : index
    %2 = vector.load %arg2[%c0_2, %c0_3, %c0_4] : memref<1x2x80xf32, #tpu.memory_space<vmem>>, vector<1x2x80xf32>
    %3 = vector.shape_cast %2 : vector<1x2x80xf32> to vector<2x80xf32>
    %c0_5 = arith.constant 0 : index
    %c0_6 = arith.constant 0 : index
    %c0_7 = arith.constant 0 : index
    %4 = vector.load %arg3[%c0_5, %c0_6, %c0_7] : memref<1x2x8xf32, #tpu.memory_space<vmem>>, vector<1x2x8xf32>
    %5 = vector.shape_cast %4 : vector<1x2x8xf32> to vector<2x8xf32>
    %c0_8 = arith.constant 0 : index
    %c0_9 = arith.constant 0 : index
    %6 = vector.load %arg4[%c0_8, %c0_9] : memref<32x32xf32, #tpu.memory_space<vmem>>, vector<32x32xf32>
    %cst = arith.constant dense<0.000000e+00> : vector<16x32xf32>
    %7 = tpu.matmul %1, %6, %cst {dimension_numbers = #tpu.dot_dimension_numbers<[1], [0], [0], [1], [0, 0, 1, 1], [], []>} : vector<16x32xf32>, vector<32x32xf32>, vector<16x32xf32> -> vector<16x32xf32>
    %c0_10 = arith.constant 0 : index
    %c0_11 = arith.constant 0 : index
    %8 = vector.load %arg5[%c0_10, %c0_11] : memref<80x32xf32, #tpu.memory_space<vmem>>, vector<80x32xf32>
    %cst_12 = arith.constant dense<0.000000e+00> : vector<2x32xf32>
    %9 = tpu.matmul %3, %8, %cst_12 {dimension_numbers = #tpu.dot_dimension_numbers<[1], [0], [0], [1], [0, 0, 1, 1], [], []>} : vector<2x80xf32>, vector<80x32xf32>, vector<2x32xf32> -> vector<2x32xf32>
    %10 = vector.shape_cast %7 : vector<16x32xf32> to vector<2x8x32xf32>
    %11 = vector.shape_cast %9 : vector<2x32xf32> to vector<2x1x32xf32>
    %12 = vector.broadcast %11 : vector<2x1x32xf32> to vector<2x8x32xf32>
    %13 = arith.addf %10, %12 : vector<2x8x32xf32>
    %14 = math.tanh %13 : vector<2x8x32xf32>
    %c0_13 = arith.constant 0 : index
    %c0_14 = arith.constant 0 : index
    %15 = vector.load %arg6[%c0_13, %c0_14] : memref<1x32xf32, #tpu.memory_space<vmem>>, vector<1x32xf32>
    %16 = vector.shape_cast %15 : vector<1x32xf32> to vector<1x1x32xf32>
    %17 = vector.broadcast %16 : vector<1x1x32xf32> to vector<2x8x32xf32>
    %18 = arith.mulf %14, %17 : vector<2x8x32xf32>
    %cst_15 = arith.constant dense<0.000000e+00> : vector<2x8xf32>
    %19 = vector.multi_reduction <add>, %18, %cst_15 [2] : vector<2x8x32xf32> to vector<2x8xf32>
    %cst_16 = arith.constant 0.000000e+00 : f32
    %20 = vector.broadcast %cst_16 : f32 to vector<2x8xf32>
    %21 = arith.cmpf ogt, %5, %20 : vector<2x8xf32>
    %cst_17 = arith.constant 0xFF800000 : f32
    %22 = vector.broadcast %cst_17 : f32 to vector<2x8xf32>
    %23 = arith.select %21, %22, %19 : vector<2x8xi1>, vector<2x8xf32>
    %cst_18 = arith.constant dense<0xFF800000> : vector<2xf32>
    %24 = vector.multi_reduction <maximumf>, %23, %cst_18 [1] : vector<2x8xf32> to vector<2xf32>
    %25 = vector.shape_cast %24 : vector<2xf32> to vector<2x1xf32>
    %26 = vector.broadcast %25 : vector<2x1xf32> to vector<2x8xf32>
    %27 = arith.subf %23, %26 : vector<2x8xf32>
    %28 = math.exp %27 : vector<2x8xf32>
    %cst_19 = arith.constant dense<0.000000e+00> : vector<2xf32>
    %29 = vector.multi_reduction <add>, %28, %cst_19 [1] : vector<2x8xf32> to vector<2xf32>
    %30 = vector.shape_cast %29 : vector<2xf32> to vector<2x1xf32>
    %31 = vector.broadcast %30 : vector<2x1xf32> to vector<2x8xf32>
    %32 = arith.divf %28, %31 : vector<2x8xf32>
    %c0_20 = arith.constant 0 : index
    %c0_21 = arith.constant 0 : index
    %c0_22 = arith.constant 0 : index
    %33 = vector.load %arg7[%c0_20, %c0_21, %c0_22] : memref<1x2x8xf32, #tpu.memory_space<vmem>>, vector<1x2x8xf32>
    %34 = vector.shape_cast %33 : vector<1x2x8xf32> to vector<2x8xf32>
    %35 = vector.shape_cast %32 : vector<2x8xf32> to vector<1x2x8xf32>
    tpu.vector_store %arg7[%c0_20, %c0_21, %c0_22], %35 {strides = array<i32>} : memref<1x2x8xf32, #tpu.memory_space<vmem>>, vector<1x2x8xf32>,
    return
  }
  func.func @transform_0(%arg0: i32) -> (i32, i32, i32) {
    %c0_i32 = arith.constant 0 : i32
    %c0_i32_0 = arith.constant 0 : i32
    %c0_i32_1 = arith.constant 0 : i32
    return %arg0, %c0_i32, %c0_i32_0 : i32, i32, i32
  }
  func.func @transform_1(%arg0: i32) -> (i32, i32, i32) {
    %c0_i32 = arith.constant 0 : i32
    %c0_i32_0 = arith.constant 0 : i32
    %c0_i32_1 = arith.constant 0 : i32
    return %arg0, %c0_i32, %c0_i32_0 : i32, i32, i32
  }
  func.func @transform_2(%arg0: i32) -> (i32, i32, i32) {
    %c0_i32 = arith.constant 0 : i32
    %c0_i32_0 = arith.constant 0 : i32
    %c0_i32_1 = arith.constant 0 : i32
    return %arg0, %c0_i32, %c0_i32_0 : i32, i32, i32
  }
  func.func @transform_3(%arg0: i32) -> (i32, i32) {
    %c0_i32 = arith.constant 0 : i32
    %c0_i32_0 = arith.constant 0 : i32
    %c0_i32_1 = arith.constant 0 : i32
    return %c0_i32, %c0_i32_0 : i32, i32
  }
  func.func @transform_4(%arg0: i32) -> (i32, i32) {
    %c0_i32 = arith.constant 0 : i32
    %c0_i32_0 = arith.constant 0 : i32
    %c0_i32_1 = arith.constant 0 : i32
    return %c0_i32, %c0_i32_0 : i32, i32
  }
  func.func @transform_5(%arg0: i32) -> (i32, i32) {
    %c0_i32 = arith.constant 0 : i32
    %c0_i32_0 = arith.constant 0 : i32
    %c0_i32_1 = arith.constant 0 : i32
    return %c0_i32, %c0_i32_0 : i32, i32
  }
  func.func @transform_6(%arg0: i32) -> (i32, i32, i32) {
    %c0_i32 = arith.constant 0 : i32
    %c0_i32_0 = arith.constant 0 : i32
    %c0_i32_1 = arith.constant 0 : i32
    return %arg0, %c0_i32, %c0_i32_0 : i32, i32, i32
  }
}

</mosaic_0001>

<llo_original>
// kernel: tpu_custom_call.1
$region0: #{tpu_custom_call.1}
  #allocation0 [shape = 'u32[]', space=smem, size = 0x4, offset = 0x4, fixed_abs, tag = 'smem constant byte address 0x4 - core index']
  #allocation1 [shape = 'u32[72,128]{1,0:T(1,128)}', space=vmem, size = 0x9000, scoped, tag = 'internal scratch']
  %s0 = inlined_call_operand.vmem [shape: f32[2,16,32], index: 0, kind: input, shape index: {}]
  %s1 = inlined_call_operand.vmem [shape: f32[2,2,80], index: 1, kind: input, shape index: {}]
  %s2 = inlined_call_operand.vmem [shape: f32[2,2,8], index: 2, kind: input, shape index: {}]
  %s3 = inlined_call_operand.vmem [shape: f32[32,32], index: 3, kind: input, shape index: {}]
  %s4 = inlined_call_operand.vmem [shape: f32[80,32], index: 4, kind: input, shape index: {}]
  %s5 = inlined_call_operand.vmem [shape: f32[1,32], index: 5, kind: input, shape index: {}]
  %s6 = inlined_call_operand.hbm [shape: f32[2,2,8], index: 6, kind: output, shape index: {}]
  %s7 = sld [smem:[#allocation0]]
  $region57: #{tpu_custom_call.1} parent=0
    _
  %s9 = ssub.s32 1, %s7
  %s10 = scalar_select 0, %s9, %s7
  $region1: #{tpu_custom_call.1} parent=0
    #allocation2 [shape = 'u8[2048]{0}', space=vmem, size = 0x800, scoped, tag = 'output window, operand 0']
    #allocation3 [shape = 's32[2]{0}', space=sflag, size = 0x8, scoped, tag = 'scoped memory for tpu_custom_call.1']
    %11 = vsyncpa [#allocation3], 0
    %s12 = scalar_lea.sflag [#allocation3], 1
    %13 = vsyncpa %s12, 0
    loop: start=0, step=1, limit=4
    $region2: #{tpu_custom_call.1} parent=1 // loop_pre_header
      _
    $region3: #{tpu_custom_call.1} parent=1 // loop_header
      %s15 = sphi 0, %s19
      %p16 = scmp.ge.s32.totalorder %s15, 4
      %s25 = sphi 0, %s27
      %s28 = sphi 0, %s25
      %s29 = sphi 0, %s28
      %s45 = sphi 0, %s29
      %s51 = sphi 0, %s53
      %s54 = sphi 0, %s51
      %s55 = sphi 0, %s54
      %s71 = sphi 0, %s55
      %s77 = sphi 0, %s79
      %s80 = sphi 0, %s77
      %s81 = sphi 0, %s80
      %s97 = sphi 0, %s81
      %s101 = sphi 0, %s101
      %s103 = sphi 0, %s101
      %s104 = sphi 0, %s103
      %s118 = sphi 0, %s104
      %s122 = sphi 0, %s122
      %s124 = sphi 0, %s122
      %s125 = sphi 0, %s124
      %s139 = sphi 0, %s125
      %s143 = sphi 0, %s143
      %s145 = sphi 0, %s143
      %s146 = sphi 0, %s145
      %s160 = sphi 0, %s146
      %s166 = sphi 0, %s168
      %s169 = sphi 0, %s166
      %s170 = sphi 0, %s169
      %s186 = sphi 0, %s170
    $region4: #{tpu_custom_call.1} parent=1 // loop_header_branch
      %18 = sbr.rel (%p16) target = $region8
    $region5: #{tpu_custom_call.1} parent=1 // loop_body
      %s20 = ssub.s32 %s15, 1
      %s21 = ssub.s32 %s15, 2
      %s22 = sadd.s32 %s15, 1
      %s23 = ssub.s32 %s15, %s22
      %p24 = scmp.eq.s32.totalorder %s23, 0
      %s26 = sadd.s32 %s25, 1
      %s27 = scalar_select %p24, %s25, %s26
      %p30 = pneg %p24
      %p31 = scmp.eq.s32.totalorder %s15, 1
      %p32 = por %p30, %p31
      %p33 = scmp.ne.s32.totalorder %s25, %s28
      %p34 = scmp.eq.s32.totalorder %s15, 0
      %p35 = por %p33, %p34
      %p36 = scmp.ne.s32.totalorder %s25, %s28
      %p37 = scmp.eq.s32.totalorder %s20, 1
      %p38 = por %p36, %p37
      %p39 = scmp.ne.s32.totalorder %s28, %s29
      %p40 = scmp.eq.s32.totalorder %s20, 0
      %p41 = por %p39, %p40
      %p42 = scmp.ne.s32.totalorder %s28, %s29
      %p43 = scmp.eq.s32.totalorder %s21, 1
      %p44 = por %p42, %p43
      %p46 = scmp.ne.s32.totalorder %s29, %s45
      %p47 = scmp.eq.s32.totalorder %s21, 0
      %p48 = por %p46, %p47
      %s49 = ssub.s32 %s15, %s22
      %p50 = scmp.eq.s32.totalorder %s49, 0
      %s52 = sadd.s32 %s51, 1
      %s53 = scalar_select %p50, %s51, %s52
      %p56 = pneg %p50
      %p57 = scmp.eq.s32.totalorder %s15, 1
      %p58 = por %p56, %p57
      %p59 = scmp.ne.s32.totalorder %s51, %s54
      %p60 = scmp.eq.s32.totalorder %s15, 0
      %p61 = por %p59, %p60
      %p62 = scmp.ne.s32.totalorder %s51, %s54
      %p63 = scmp.eq.s32.totalorder %s20, 1
      %p64 = por %p62, %p63
      %p65 = scmp.ne.s32.totalorder %s54, %s55
      %p66 = scmp.eq.s32.totalorder %s20, 0
      %p67 = por %p65, %p66
      %p68 = scmp.ne.s32.totalorder %s54, %s55
      %p69 = scmp.eq.s32.totalorder %s21, 1
      %p70 = por %p68, %p69
      %p72 = scmp.ne.s32.totalorder %s55, %s71
      %p73 = scmp.eq.s32.totalorder %s21, 0
      %p74 = por %p72, %p73
      %s75 = ssub.s32 %s15, %s22
      %p76 = scmp.eq.s32.totalorder %s75, 0
      %s78 = sadd.s32 %s77, 1
      %s79 = scalar_select %p76, %s77, %s78
      %p82 = pneg %p76
      %p83 = scmp.eq.s32.totalorder %s15, 1
      %p84 = por %p82, %p83
      %p85 = scmp.ne.s32.totalorder %s77, %s80
      %p86 = scmp.eq.s32.totalorder %s15, 0
      %p87 = por %p85, %p86
      %p88 = scmp.ne.s32.totalorder %s77, %s80
      %p89 = scmp.eq.s32.totalorder %s20, 1
      %p90 = por %p88, %p89
      %p91 = scmp.ne.s32.totalorder %s80, %s81
      %p92 = scmp.eq.s32.totalorder %s20, 0
      %p93 = por %p91, %p92
      %p94 = scmp.ne.s32.totalorder %s80, %s81
      %p95 = scmp.eq.s32.totalorder %s21, 1
      %p96 = por %p94, %p95
      %p98 = scmp.ne.s32.totalorder %s81, %s97
      %p99 = scmp.eq.s32.totalorder %s21, 0
      %p100 = por %p98, %p99
      %s102 = sadd.s32 %s101, 1
      %p105 = scmp.eq.s32.totalorder %s15, 1
      %p106 = scmp.ne.s32.totalorder %s101, %s103
      %p107 = scmp.eq.s32.totalorder %s15, 0
      %p108 = por %p106, %p107
      %p109 = scmp.ne.s32.totalorder %s101, %s103
      %p110 = scmp.eq.s32.totalorder %s20, 1
      %p111 = por %p109, %p110
      %p112 = scmp.ne.s32.totalorder %s103, %s104
      %p113 = scmp.eq.s32.totalorder %s20, 0
      %p114 = por %p112, %p113
      %p115 = scmp.ne.s32.totalorder %s103, %s104
      %p116 = scmp.eq.s32.totalorder %s21, 1
      %p117 = por %p115, %p116
      %p119 = scmp.ne.s32.totalorder %s104, %s118
      %p120 = scmp.eq.s32.totalorder %s21, 0
      %p121 = por %p119, %p120
      %s123 = sadd.s32 %s122, 1
      %p126 = scmp.eq.s32.totalorder %s15, 1
      %p127 = scmp.ne.s32.totalorder %s122, %s124
      %p128 = scmp.eq.s32.totalorder %s15, 0
      %p129 = por %p127, %p128
      %p130 = scmp.ne.s32.totalorder %s122, %s124
      %p131 = scmp.eq.s32.totalorder %s20, 1
      %p132 = por %p130, %p131
      %p133 = scmp.ne.s32.totalorder %s124, %s125
      %p134 = scmp.eq.s32.totalorder %s20, 0
      %p135 = por %p133, %p134
      %p136 = scmp.ne.s32.totalorder %s124, %s125
      %p137 = scmp.eq.s32.totalorder %s21, 1
      %p138 = por %p136, %p137
      %p140 = scmp.ne.s32.totalorder %s125, %s139
      %p141 = scmp.eq.s32.totalorder %s21, 0
      %p142 = por %p140, %p141
      %s144 = sadd.s32 %s143, 1
      %p147 = scmp.eq.s32.totalorder %s15, 1
      %p148 = scmp.ne.s32.totalorder %s143, %s145
      %p149 = scmp.eq.s32.totalorder %s15, 0
      %p150 = por %p148, %p149
      %p151 = scmp.ne.s32.totalorder %s143, %s145
      %p152 = scmp.eq.s32.totalorder %s20, 1
      %p153 = por %p151, %p152
      %p154 = scmp.ne.s32.totalorder %s145, %s146
      %p155 = scmp.eq.s32.totalorder %s20, 0
      %p156 = por %p154, %p155
      %p157 = scmp.ne.s32.totalorder %s145, %s146
      %p158 = scmp.eq.s32.totalorder %s21, 1
      %p159 = por %p157, %p158
      %p161 = scmp.ne.s32.totalorder %s146, %s160
      %p162 = scmp.eq.s32.totalorder %s21, 0
      %p163 = por %p161, %p162
      %s164 = ssub.s32 %s15, %s22
      %p165 = scmp.eq.s32.totalorder %s164, 0
      %s167 = sadd.s32 %s166, 1
      %s168 = scalar_select %p165, %s166, %s167
      %p171 = pneg %p165
      %p172 = scmp.eq.s32.totalorder %s15, 1
      %p173 = por %p171, %p172
      %p174 = scmp.ne.s32.totalorder %s166, %s169
      %p175 = scmp.eq.s32.totalorder %s15, 0
      %p176 = por %p174, %p175
      %p177 = scmp.ne.s32.totalorder %s166, %s169
      %p178 = scmp.eq.s32.totalorder %s20, 1
      %p179 = por %p177, %p178
      %p180 = scmp.ne.s32.totalorder %s169, %s170
      %p181 = scmp.eq.s32.totalorder %s20, 0
      %p182 = por %p180, %p181
      %p183 = scmp.ne.s32.totalorder %s169, %s170
      %p184 = scmp.eq.s32.totalorder %s21, 1
      %p185 = por %p183, %p184
      %p187 = scmp.ne.s32.totalorder %s170, %s186
      %p188 = scmp.eq.s32.totalorder %s21, 0
      %p189 = por %p187, %p188
      %p190 = scmp.le.s32.totalorder 1, %s15
      %p191 = scmp.lt.s32.totalorder %s15, 3
      %p192 = pnand %p190, %p191
      %p193 = pneg %p192
      // Predicated region
      $region9: #{tpu_custom_call.1} parent=5 // pred_check
        _
      $region10: #{tpu_custom_call.1} parent=5 // pred_check_branch
        %195 = sbr.rel (%p192) target = $region12
      $region11: #{tpu_custom_call.1} parent=5 // pred_region
        %s196 = ssub.s32 %s15, 1
        // Predicated region
        $region13: #{tpu_custom_call.1} parent=11 // pred_check
          %p197 = pneg %p114
        $region14: #{tpu_custom_call.1} parent=11 // pred_check_branch
          %199 = sbr.rel (%p197) target = $region16
        $region15: #{tpu_custom_call.1} parent=11 // pred_region
          _
        $region16: #{tpu_custom_call.1} parent=11 // pred_fallthru
          _
        // Predicated region
        $region17: #{tpu_custom_call.1} parent=11 // pred_check
          %p200 = pneg %p135
        $region18: #{tpu_custom_call.1} parent=11 // pred_check_branch
          %202 = sbr.rel (%p200) target = $region20
        $region19: #{tpu_custom_call.1} parent=11 // pred_region
          _
        $region20: #{tpu_custom_call.1} parent=11 // pred_fallthru
          _
        // Predicated region
        $region21: #{tpu_custom_call.1} parent=11 // pred_check
          %p203 = pneg %p156
        $region22: #{tpu_custom_call.1} parent=11 // pred_check_branch
          %205 = sbr.rel (%p203) target = $region24
        $region23: #{tpu_custom_call.1} parent=11 // pred_region
          _
        $region24: #{tpu_custom_call.1} parent=11 // pred_fallthru
          _
      $region12: #{tpu_custom_call.1} parent=5 // pred_fallthru
        _
      %p206 = scmp.lt.s32.totalorder %s15, 2
      // Predicated region
      $region25: #{tpu_custom_call.1} parent=5 // pred_check
        %p207 = pneg %p206
      $region26: #{tpu_custom_call.1} parent=5 // pred_check_branch
        %209 = sbr.rel (%p207) target = $region28
      $region27: #{tpu_custom_call.1} parent=5 // pred_region
        // Predicated region
        $region29: #{tpu_custom_call.1} parent=27 // pred_check
          %p210 = pneg %p35
        $region30: #{tpu_custom_call.1} parent=27 // pred_check_branch
          %212 = sbr.rel (%p210) target = $region32
        $region31: #{tpu_custom_call.1} parent=27 // pred_region
          %p213 = scmp.lt.s32.totalorder %s15, 1
          %s214 = scalar_select %p213, %s15, 1
          %s215 = smul.addr %s214, 2
          %s216 = smul.addr %s215, 8
          %s217 = scalar_lea.vmem %s0, %s216
        $region32: #{tpu_custom_call.1} parent=27 // pred_fallthru
          _
        // Predicated region
        $region33: #{tpu_custom_call.1} parent=27 // pred_check
          %p218 = pneg %p61
        $region34: #{tpu_custom_call.1} parent=27 // pred_check_branch
          %220 = sbr.rel (%p218) target = $region36
        $region35: #{tpu_custom_call.1} parent=27 // pred_region
          %p221 = scmp.lt.s32.totalorder %s15, 1
          %s222 = scalar_select %p221, %s15, 1
          %s223 = smul.addr %s222, 2
          %s224 = scalar_lea.vmem %s1, %s223
        $region36: #{tpu_custom_call.1} parent=27 // pred_fallthru
          _
        // Predicated region
        $region37: #{tpu_custom_call.1} parent=27 // pred_check
          %p225 = pneg %p87
        $region38: #{tpu_custom_call.1} parent=27 // pred_check_branch
          %227 = sbr.rel (%p225) target = $region40
        $region39: #{tpu_custom_call.1} parent=27 // pred_region
          %p228 = scmp.lt.s32.totalorder %s15, 1
          %s229 = scalar_select %p228, %s15, 1
          %s230 = smul.addr %s229, 2
          %s231 = scalar_lea.vmem %s2, %s230
        $region40: #{tpu_custom_call.1} parent=27 // pred_fallthru
          _
      $region28: #{tpu_custom_call.1} parent=5 // pred_fallthru
        _
      %p232 = scmp.le.s32.totalorder 1, %s15
      %p233 = scmp.lt.s32.totalorder %s15, 3
      %p234 = pnand %p232, %p233
      %p235 = pneg %p234
      // Predicated region
      $region41: #{tpu_custom_call.1} parent=5 // pred_check
        _
      $region42: #{tpu_custom_call.1} parent=5 // pred_check_branch
        %237 = sbr.rel (%p234) target = $region44
      $region43: #{tpu_custom_call.1} parent=5 // pred_region
        %s238 = ssub.s32 %s15, 1
        %p239 = scmp.lt.s32.totalorder %s20, 1
        %s240 = scalar_select %p239, %s20, 1
        %s241 = smul.addr %s240, 2
        %s242 = smul.addr %s241, 8
        %s243 = scalar_lea.vmem %s0, %s242
        %p244 = pneg %p41
        %p245 = pneg %p38
        %p246 = scmp.lt.s32.totalorder %s20, 1
        %s247 = scalar_select %p246, %s20, 1
        %s248 = smul.addr %s247, 2
        %s249 = scalar_lea.vmem %s1, %s248
        %p250 = pneg %p67
        %p251 = pneg %p64
        %p252 = scmp.lt.s32.totalorder %s20, 1
        %s253 = scalar_select %p252, %s20, 1
        %s254 = smul.addr %s253, 2
        %s255 = scalar_lea.vmem %s2, %s254
        %p256 = pneg %p93
        %p257 = pneg %p90
        %p258 = pneg %p114
        %p259 = pneg %p111
        %p260 = pneg %p135
        %p261 = pneg %p132
        %p262 = pneg %p156
        %p263 = pneg %p153
        %p264 = pneg %p182
        %p265 = pneg %p179
        %s266 = sand.u32 %s169, 1
        %s267 = scalar_lea.sflag [#allocation3], %s266
        %s268 = sand.u32 %s169, 1
        %s269 = smul.addr %s268, 2
        %s270 = scalar_lea.vmem [#allocation2], %s269
        %p271 = scmp.lt.s32.totalorder %s20, 1
        %s272 = scalar_select %p271, %s20, 1
        %s273 = smul.addr %s272, 2
        %s274 = smul.addr %s273, 8
        %s275 = scalar_lea.vmem %s0, %s274
        %p276 = scmp.lt.s32.totalorder %s20, 1
        %s277 = scalar_select %p276, %s20, 1
        %s278 = smul.addr %s277, 2
        %s279 = scalar_lea.vmem %s1, %s278
        %p280 = scmp.lt.s32.totalorder %s20, 1
        %s281 = scalar_select %p280, %s20, 1
        %s282 = smul.addr %s281, 2
        %s283 = scalar_lea.vmem %s2, %s282
        %v284 = vld [vmem:[%s275] sm:$0xff]
        %v285 = vld [vmem:[%s275 + $0x8] sm:$0xff]
        %v286 = vld [vmem:[%s279] sm:$0x3]
        %v287 = vld [vmem:[%s283] sm:$0x3]
        %v288 = vld [vmem:[%s3] sm:$0xff]
        %v289 = vld [vmem:[%s3 + $0x8] sm:$0xff]
        %v290 = vld [vmem:[%s3 + $0x10] sm:$0xff]
        %v291 = vld [vmem:[%s3 + $0x18] sm:$0xff]
        %vm292 = vcmask 261120
        %v294 = vsel %vm292, %v284, 0
        %v297 = vsel %vm292, %v285, 0
        %299 = vmatpush.msra.mxu0 0.0
        %300 = vmatpush.msra.mxu0 0.0
        %301 = vmatpush.msra.mxu0 0.0
        %302 = vmatpush.msra.mxu0 0.0
        %303 = vmatpush.msra.mxu0 0.0
        %304 = vmatpush.msra.mxu0 0.0
        %305 = vmatpush.msra.mxu0 0.0
        %306 = vmatpush.msra.mxu0 0.0
        %307 = vmatpush.msra.mxu0 0.0
        %308 = vmatpush.msra.mxu0 0.0
        %309 = vmatpush.msra.mxu0 0.0
        %310 = vmatpush.msra.mxu0 0.0
        %311 = vmatpush.msra.mxu0 %v291
        %312 = vmatpush.msra.mxu0 %v290
        %313 = vmatpush.msra.mxu0 %v289
        %314 = vmatpush.msra.mxu0 %v288
        %315 = vmatmul.f32.gmra.mxu0 %v294
        %v316 = vpop.f32.mrf.mxu0
        %v317 = vadd.f32 0.0, %v316
        %318 = vmatmul.f32.gmra.mxu0 %v297
        %v319 = vpop.f32.mrf.mxu0
        %v320 = vadd.f32 0.0, %v319
        %321 = vdwg.mxu0
        %v322 = vld [vmem:[%s4] sm:$0xff]
        %v323 = vld [vmem:[%s4 + $0x8] sm:$0xff]
        %v324 = vld [vmem:[%s4 + $0x10] sm:$0xff]
        %v325 = vld [vmem:[%s4 + $0x18] sm:$0xff]
        %v326 = vld [vmem:[%s4 + $0x20] sm:$0xff]
        %v327 = vld [vmem:[%s4 + $0x28] sm:$0xff]
        %v328 = vld [vmem:[%s4 + $0x30] sm:$0xff]
        %v329 = vld [vmem:[%s4 + $0x38] sm:$0xff]
        %v330 = vld [vmem:[%s4 + $0x40] sm:$0xff]
        %v331 = vld [vmem:[%s4 + $0x48] sm:$0xff]
        %vm332 = vcmask 654336
        %v334 = vsel %vm332, %v286, 0
        %336 = vmatpush.msra.mxu0 0.0
        %337 = vmatpush.msra.mxu0 0.0
        %338 = vmatpush.msra.mxu0 0.0
        %339 = vmatpush.msra.mxu0 0.0
        %340 = vmatpush.msra.mxu0 0.0
        %341 = vmatpush.msra.mxu0 0.0
        %342 = vmatpush.msra.mxu0 %v331
        %343 = vmatpush.msra.mxu0 %v330
        %344 = vmatpush.msra.mxu0 %v329
        %345 = vmatpush.msra.mxu0 %v328
        %346 = vmatpush.msra.mxu0 %v327
        %347 = vmatpush.msra.mxu0 %v326
        %348 = vmatpush.msra.mxu0 %v325
        %349 = vmatpush.msra.mxu0 %v324
        %350 = vmatpush.msra.mxu0 %v323
        %351 = vmatpush.msra.mxu0 %v322
        %352 = vmatmul.f32.gmra.mxu0 %v334
        %v353 = vpop.f32.mrf.mxu0
        %v354 = vadd.f32 0.0, %v353
        %355 = vdwg.mxu0
        %v357 = vrot.slane %v354, 1
        %v358 = vperm.slane %v354, 0
        %v359 = vperm.slane %v357, 0
        %v362 = vadd.f32 %v317, %v358
        %v363 = vadd.f32 %v320, %v359
        %v364 = vtanh.pop %v362
        %v365 = vtanh.pop %v363
        %v366 = vld [vmem:[%s5] sm:$0x1]
        %v368 = vperm.slane %v366, 0
        %v370 = vmul.f32 %v364, %v368
        %v371 = vmul.f32 %v365, %v368
        %v372 = vsel %vm292, %v370, 0.0
        %373 = vadd.xlane.f32.xlu0 %v372
        %v374 = vpop.xlane.xlu0 %373
        %v375 = vsel %vm292, %v371, 0.0
        %376 = vadd.xlane.f32.xlu0 %v375
        %v377 = vpop.xlane.xlu0 %376
        %vm378 = vcmp.gt.f32.partialorder %v287, 0.0
        %v381 = vlaneseq
        %v382 = vand.u32 %v381, 127
        %v383 = vperm.slane %v374, %v382
        %v384 = vperm.slane %v377, %v382
        %vm385 = vcmask 1041409
        %v386 = vsel %vm385, %v384, %v383
        %v388 = vsel %vm378, -inf, %v386
        %vm389 = vcmask 58368
        %v390 = vsel %vm389, %v388, -inf
        %391 = vmax.xlane.f32.xlu0 %v390
        %v392 = vpop.xlane.xlu0 %391
        %v393 = vsub.f32 %v388, %v392
        %v394 = vmul.f32 %v393, 1.442695
        %v395 = vpow.pop %v394
        %v396 = vsel %vm389, %v395, 0.0
        %397 = vadd.xlane.f32.xlu0 %v396
        %v398 = vpop.xlane.xlu0 %397
        %v399 = vrcp.pop %v398
        %v400 = vmul.f32 %v398, %v399
        %v401 = vsub.f32 1.0, %v400
        %v402 = vmul.f32 %v399, %v401
        %v403 = vadd.f32 %v399, %v402
        %vm404 = vweird.f32 %v398
        %vm405 = vweird.f32 %v399
        %vm406 = vmor %vm404, %vm405
        %v407 = vsel %vm406, %v399, %v403
        %v408 = vand.u32 2147483647, %v398
        %vm409 = vcmp.eq.f32.partialorder %v408, 8.507059e+37
        %v410 = vand.u32 %v398, 2147483648
        %v411 = vor.u32 1.1754944e-38, %v410
        %v412 = vsel %vm409, %v411, %v407
        %v413 = vmul.f32 %v395, %v412
        %414 = vst.msk [vmem:[%s270] sm:$0x3] %vm389, %v413
        %s415 = sand.u32 %s169, 1
        %s416 = scalar_lea.sflag [#allocation3], %s415
        %s417 = sand.u32 %s169, 1
        %s418 = smul.addr %s417, 2
        %s419 = scalar_lea.vmem [#allocation2], %s418
        // Predicated region
        $region45: #{tpu_custom_call.1} parent=43 // pred_check
          %p420 = pneg %p179
        $region46: #{tpu_custom_call.1} parent=43 // pred_check_branch
          %422 = sbr.rel (%p420) target = $region48
        $region47: #{tpu_custom_call.1} parent=43 // pred_region
          %424 = vsyncadd %s416, 0
          %s425 = smul.addr %s20, 2
          %s426 = scalar_lea.hbm %s6, %s425
          %s428 = sshll.u32 %s419, 4
          %s429 = int_to_ptr.vmem [resolvable:$true] %s428
          %s430 = sshll.u32 %s426, 4
          %s431 = int_to_ptr.hbm [resolvable:$true] %s430
          %433 = dma.vmem_to_hbm [thread:$0]  %s429, 32, %s431, %s416
        $region48: #{tpu_custom_call.1} parent=43 // pred_fallthru
          _
      $region44: #{tpu_custom_call.1} parent=5 // pred_fallthru
        _
      %p434 = scmp.le.s32.totalorder 2, %s15
      // Predicated region
      $region49: #{tpu_custom_call.1} parent=5 // pred_check
        %p435 = pneg %p434
      $region50: #{tpu_custom_call.1} parent=5 // pred_check_branch
        %437 = sbr.rel (%p435) target = $region52
      $region51: #{tpu_custom_call.1} parent=5 // pred_region
        %s438 = ssub.s32 %s15, 2
        // Predicated region
        $region53: #{tpu_custom_call.1} parent=51 // pred_check
          %p439 = pneg %p185
        $region54: #{tpu_custom_call.1} parent=51 // pred_check_branch
          %441 = sbr.rel (%p439) target = $region56
        $region55: #{tpu_custom_call.1} parent=51 // pred_region
          %s442 = sand.u32 %s170, 1
          %s443 = scalar_lea.sflag [#allocation3], %s442
          %s444 = sand.u32 %s170, 1
          %s445 = smul.addr %s444, 2
          %s446 = scalar_lea.vmem [#allocation2], %s445
          %448 = dma.done %s443, 32
        $region56: #{tpu_custom_call.1} parent=51 // pred_fallthru
          _
      $region52: #{tpu_custom_call.1} parent=5 // pred_fallthru
        _
    $region6: #{tpu_custom_call.1} parent=1 // loop_footer
      %s19 = sadd.s32 1, %s15
    $region7: #{tpu_custom_call.1} parent=1 // loop_footer_branch
      %14 = sbr.rel target = $region3
    $region8: #{tpu_custom_call.1} parent=1 // loop_exit
      _
    %449 = vsyncpa [#allocation3], 1
    %s450 = scalar_lea.sflag [#allocation3], 1
    %451 = vsyncpa %s450, 1

</llo_original>
